<compile_context>
chip_gen: v6e
topology: v6e:2x2x1
jax: 0.10.0
libtpu: 0.0.40
codegen_flags: <defaults>
</compile_context>

<pallas_src>
import functools
import math

import jax
import jax.numpy as jnp
from jax.experimental import pallas as pl
from jax.experimental.pallas import tpu as pltpu

EPS = 1e-5


def _make_kernel(has_bias, packed, eps):
    def kernel(*refs):
        if has_bias:
            x_ref, w_ref, b_ref, o_ref = refs
        else:
            x_ref, w_ref, o_ref = refs
            b_ref = None
        x = x_ref[...]
        inv_d = jnp.float32(1.0 / x.shape[-1])
        # Row mean with f32 accumulation straight from the (possibly bf16) tile.
        mean = jnp.sum(x, axis=-1, keepdims=True, dtype=jnp.float32) * inv_d
        if packed:
            # bf16-packed element work (v6e/v7x bf16 VPU); only f32 row scalars.
            xc = x - mean.astype(x.dtype)
            var = jnp.sum(xc * xc, axis=-1, keepdims=True,
                          dtype=jnp.float32) * inv_d
            inv = jax.lax.rsqrt(var + jnp.float32(eps)).astype(x.dtype)
            y = xc * inv * w_ref[...]
            if has_bias:
                y = y + b_ref[...]
        else:
            # f32 math path (f32 inputs, or sub-32-bit inputs on v5e: no bf16 VPU).
            xc = x.astype(jnp.float32) - mean
            var = jnp.sum(xc * xc, axis=-1, keepdims=True) * inv_d
            inv = jax.lax.rsqrt(var + jnp.float32(eps))
            y = xc * inv * w_ref[...].astype(jnp.float32)
            if has_bias:
                y = y + b_ref[...].astype(jnp.float32)
        # NOTE: the ragged final grid block processes OOB garbage rows; all ops
        # above are row-local so they only touch discarded output rows.  Do NOT
        # add cross-row reductions here without masking them.
        o_ref[...] = y.astype(o_ref.dtype)

    return kernel


@functools.lru_cache(maxsize=1)
def _device_info():
    """(physical VMEM bytes per TensorCore, VPU-is-bf16-native) for this backend."""
    kind = ""
    try:
        kind = jax.devices()[0].device_kind.lower()
    except Exception:
        pass
    vmem_cap = None
    try:
        vmem_cap = int(pltpu.get_tpu_info().vmem_capacity_bytes)
    except Exception:
        vmem_cap = None
    if not vmem_cap or vmem_cap <= 0:
        if "v7" in kind:
            vmem_cap = 64 << 20
        elif "v5" in kind or "v6" in kind:
            vmem_cap = 128 << 20
        else:
            vmem_cap = 64 << 20  # conservative default for unknown parts
    has_bf16_vpu = "v5" not in kind  # v5e has no bf16 VALU/EUP
    return vmem_cap, has_bf16_vpu


def _pick_tile_rows(rows, d, dtype_bytes, budget_bytes, packed):
    """Largest row tile whose double-buffered in/out blocks + temporaries fit the
    VMEM budget, targeting >=~4 MiB input blocks (amortize ~0.35us/step overhead)
    while keeping >=2-4 grid steps for large inputs (pipelining + v7x 2-TC split)."""
    sub = max(8, 32 // dtype_bytes)                 # sublane multiple: 8 f32, 16 bf16
    temps_per_row = (2 if packed else 4) * d * 4    # f32 temporaries in the body
    per_row = 4 * d * dtype_bytes + temps_per_row   # 2x dbl-buffered in + out + temps
    tile = max(budget_bytes // max(per_row, 1), sub)

    rows_padded = ((rows + sub - 1) // sub) * sub
    # ~4 MiB of input data per block keeps per-step overhead well under control.
    min_rows = max(-(-(4 << 20) // (d * dtype_bytes)), sub)
    if rows_padded >= 4 * min_rows:
        tile = min(tile, max(rows_padded // 4, min_rows))
    elif rows_padded >= 2 * min_rows:
        tile = min(tile, max(rows_padded // 2, min_rows))
    tile = min(tile, rows_padded)                   # never exceed the (padded) input
    return max((tile // sub) * sub, sub)


def layer_norm_pallas(x, weight, bias=None, *, tile_rows=None):
    """LayerNorm over the last axis of x with learnable weight and optional bias."""
    orig_shape = x.shape
    D = orig_shape[-1]
    rows = math.prod(orig_shape[:-1]) if len(orig_shape) > 1 else 1
    x2 = x.reshape(rows, D)

    dtype = jnp.dtype(x.dtype)
    dtype_bytes = dtype.itemsize
    has_bias = bias is not None

    vmem_cap, has_bf16_vpu = _device_info()
    # Packed element-wise math only where the VPU is bf16-native (v6e/v7x).
    packed = (dtype == jnp.bfloat16) and has_bf16_vpu

    # Generation-aware VMEM budget for the tile picker: ~5/8 of physical
    # capacity (40 MiB on v7x's 64 MiB, 80 MiB on v5e/v6e's 128 MiB).
    budget = min(max((vmem_cap * 5) // 8, 32 << 20), 96 << 20)

    sub = max(8, 32 // dtype_bytes)
    if tile_rows is None:
        tile_rows = _pick_tile_rows(rows, D, dtype_bytes, budget, packed)
    else:
        tile_rows = max((int(tile_rows) // sub) * sub, sub)

    # Never let the double-buffered working set exceed ~3/4 of physical VMEM
    # (v7x has only 64 MiB per TensorCore) -- clamps caller-supplied tiles too.
    temps_per_row = (2 if packed else 4) * D * 4
    per_row = 4 * D * dtype_bytes + temps_per_row
    safe_limit = (vmem_cap * 3) // 4
    max_tile = max((((safe_limit - (2 << 20)) // max(per_row, 1)) // sub) * sub, sub)
    tile_rows = min(tile_rows, max_tile)

    param_dtype = dtype if packed else jnp.dtype(jnp.float32)
    w2 = weight.reshape(1, D).astype(param_dtype)
    args = [x2, w2]
    if has_bias:
        args.append(bias.reshape(1, D).astype(param_dtype))

    grid = (pl.cdiv(rows, tile_rows),)

    vmem_needed = (4 * tile_rows * D * dtype_bytes
                   + tile_rows * temps_per_row
                   + (2 if has_bias else 1) * 4 * D * param_dtype.itemsize)
    vmem_limit = int(min(max(vmem_needed + (4 << 20), 32 << 20), safe_limit))

    cost = pl.CostEstimate(
        flops=int(7 * rows * D),
        transcendentals=int(rows),
        bytes_accessed=int(2 * rows * D * dtype_bytes
                           + (2 if has_bias else 1) * D * param_dtype.itemsize),
    )

    in_specs = [
        pl.BlockSpec((tile_rows, D), lambda i: (i, 0)),
        pl.BlockSpec((1, D), lambda i: (0, 0)),
    ]
    if has_bias:
        in_specs.append(pl.BlockSpec((1, D), lambda i: (0, 0)))

    # NOTE: when D % 128 != 0 (toy demo sizes) stores lower to masked partial
    # stores -- correct but slower.  Real hidden sizes (x128) are lane-dense.
    # TODO(synk): if ragged D matters in production, mask lanes in-kernel
    # (broadcasted_iota) rather than host-side pad+slice (extra HBM pass).

    out = pl.pallas_call(
        _make_kernel(has_bias, packed, EPS),
        out_shape=jax.ShapeDtypeStruct((rows, D), x.dtype),
        grid_spec=pltpu.PrefetchScalarGridSpec(
            num_scalar_prefetch=0,
            grid=grid,
            in_specs=in_specs,
            out_specs=pl.BlockSpec((tile_rows, D), lambda i: (i, 0)),
        ),
        compiler_params=pltpu.CompilerParams(
            dimension_semantics=("parallel",),
            vmem_limit_bytes=vmem_limit,
        ),
        cost_estimate=cost,
    )(*args)

    return out.reshape(orig_shape)


def make_layernorm_params(ndim, bias=True, dtype=jnp.float32):
    # Matches nn.Parameter(torch.ones(ndim)) / torch.zeros(ndim)
    weight = jnp.ones((ndim,), dtype)
    b = jnp.zeros((ndim,), dtype) if bias else None
    return weight, b


def _layer_norm_ref(x, weight, bias):
    mean = jnp.mean(x, axis=-1, keepdims=True)
    var = jnp.mean((x - mean) ** 2, axis=-1, keepdims=True)
    y = (x - mean) / jnp.sqrt(var + EPS) * weight
    if bias is not None:
        y = y + bias
    return y


if __name__ == "__main__":
    key = jax.random.PRNGKey(0)
    k0, k1, k2 = jax.random.split(key, 3)

    # Small shape consistent with the module (LayerNorm over the last dim).
    batch, seq, hidden = 2, 8, 32
    x = jax.random.normal(k0, (batch, seq, hidden), dtype=jnp.float32)
    weight, bias = make_layernorm_params(hidden, bias=True)
    weight = weight * 1.5   # make the affine part non-trivial
    bias = bias + 0.25

    out = jax.block_until_ready(layer_norm_pallas(x, weight, bias))
    ref = _layer_norm_ref(x, weight, bias)
    assert jnp.allclose(out, ref, atol=1e-4, rtol=1e-5), "mismatch (bias=True)"

    # bias=False path (dedicated kernel variant, no fabricated zeros array)
    w_nb, _ = make_layernorm_params(hidden, bias=False)
    out_nb = jax.block_until_ready(layer_norm_pallas(x, w_nb, None))
    ref_nb = _layer_norm_ref(x, w_nb, None)
    assert jnp.allclose(out_nb, ref_nb, atol=1e-4, rtol=1e-5), "mismatch (bias=False)"

    # Lane-dense hidden (128) with a ragged multi-step grid (20 rows, tile=8).
    x3 = jax.random.normal(k1, (5, 4, 128), dtype=jnp.float32)
    w3, b3 = make_layernorm_params(128, bias=True)
    out3 = jax.block_until_ready(layer_norm_pallas(x3, w3, b3, tile_rows=8))
    ref3 = _layer_norm_ref(x3, w3, b3)
    assert jnp.allclose(out3, ref3, atol=1e-4, rtol=1e-5), "mismatch (ragged grid)"

    # bf16 input: exercises the packed path on v6e/v7x, f32 fallback on v5e.
    xb = jax.random.normal(k2, (4, 16, 256), dtype=jnp.float32)
    wb, bb = make_layernorm_params(256, bias=True)
    wb = wb * 1.5
    bb = bb + 0.25
    out_b = jax.block_until_ready(layer_norm_pallas(xb.astype(jnp.bfloat16), wb, bb))
    ref_b = _layer_norm_ref(xb.astype(jnp.bfloat16).astype(jnp.float32), wb, bb)
    assert jnp.allclose(out_b.astype(jnp.float32), ref_b, atol=1e-1, rtol=1e-1), \
        "mismatch (bf16)"

    print("KERNEL_OK")
</pallas_src>

<mosaic_0001>
module attributes {stable_mosaic.version = 11 : i64} {
  func.func @kernel(%arg0: i32, %arg1: memref<16x32xf32, #tpu.memory_space<vmem>>, %arg2: memref<1x32xf32, #tpu.memory_space<vmem>>, %arg3: memref<1x32xf32, #tpu.memory_space<vmem>>, %arg4: memref<16x32xf32, #tpu.memory_space<vmem>>) attributes {dimension_semantics = [#tpu.dimension_semantics<parallel>], iteration_bounds = array<i64: 1>, scalar_prefetch = 0 : i64, scratch_operands = 0 : i64, tpu.core_type = #tpu.core_type<tc>, window_params = [{transform_indices = @transform_0, window_bounds = array<i64: 16, 32>}, {pipeline_mode = #tpu.pipeline_mode<synchronous>, transform_indices = @transform_1, window_bounds = array<i64: 1, 32>}, {pipeline_mode = #tpu.pipeline_mode<synchronous>, transform_indices = @transform_2, window_bounds = array<i64: 1, 32>}, {transform_indices = @transform_3, window_bounds = array<i64: 16, 32>}]} {
    %c0 = arith.constant 0 : index
    %c0_0 = arith.constant 0 : index
    %0 = vector.load %arg1[%c0, %c0_0] : memref<16x32xf32, #tpu.memory_space<vmem>>, vector<16x32xf32>
    %cst = arith.constant dense<0.000000e+00> : vector<16xf32>
    %1 = vector.multi_reduction <add>, %0, %cst [1] : vector<16x32xf32> to vector<16xf32>
    %2 = vector.shape_cast %1 : vector<16xf32> to vector<16x1xf32>
    %cst_1 = arith.constant 3.125000e-02 : f32
    %3 = vector.broadcast %cst_1 : f32 to vector<16x1xf32>
    %4 = arith.mulf %2, %3 : vector<16x1xf32>
    %5 = vector.broadcast %4 : vector<16x1xf32> to vector<16x32xf32>
    %6 = arith.subf %0, %5 : vector<16x32xf32>
    %7 = arith.mulf %6, %6 : vector<16x32xf32>
    %cst_2 = arith.constant dense<0.000000e+00> : vector<16xf32>
    %8 = vector.multi_reduction <add>, %7, %cst_2 [1] : vector<16x32xf32> to vector<16xf32>
    %9 = vector.shape_cast %8 : vector<16xf32> to vector<16x1xf32>
    %cst_3 = arith.constant 3.125000e-02 : f32
    %10 = vector.broadcast %cst_3 : f32 to vector<16x1xf32>
    %11 = arith.mulf %9, %10 : vector<16x1xf32>
    %cst_4 = arith.constant 9.99999974E-6 : f32
    %12 = vector.broadcast %cst_4 : f32 to vector<16x1xf32>
    %13 = arith.addf %11, %12 : vector<16x1xf32>
    %14 = math.rsqrt %13 : vector<16x1xf32>
    %15 = vector.broadcast %14 : vector<16x1xf32> to vector<16x32xf32>
    %16 = arith.mulf %6, %15 : vector<16x32xf32>
    %c0_5 = arith.constant 0 : index
    %c0_6 = arith.constant 0 : index
    %17 = vector.load %arg2[%c0_5, %c0_6] : memref<1x32xf32, #tpu.memory_space<vmem>>, vector<1x32xf32>
    %18 = vector.broadcast %17 : vector<1x32xf32> to vector<16x32xf32>
    %19 = arith.mulf %16, %18 : vector<16x32xf32>
    %c0_7 = arith.constant 0 : index
    %c0_8 = arith.constant 0 : index
    %20 = vector.load %arg3[%c0_7, %c0_8] : memref<1x32xf32, #tpu.memory_space<vmem>>, vector<1x32xf32>
    %21 = vector.broadcast %20 : vector<1x32xf32> to vector<16x32xf32>
    %22 = arith.addf %19, %21 : vector<16x32xf32>
    %c0_9 = arith.constant 0 : index
    %c0_10 = arith.constant 0 : index
    %23 = vector.load %arg4[%c0_9, %c0_10] : memref<16x32xf32, #tpu.memory_space<vmem>>, vector<16x32xf32>
    tpu.vector_store %arg4[%c0_9, %c0_10], %22 {strides = array<i32>} : memref<16x32xf32, #tpu.memory_space<vmem>>, vector<16x32xf32>,
    return
  }
  func.func @transform_0(%arg0: i32) -> (i32, i32) {
    %c0_i32 = arith.constant 0 : i32
    %c0_i32_0 = arith.constant 0 : i32
    return %arg0, %c0_i32 : i32, i32
  }
  func.func @transform_1(%arg0: i32) -> (i32, i32) {
    %c0_i32 = arith.constant 0 : i32
    %c0_i32_0 = arith.constant 0 : i32
    %c0_i32_1 = arith.constant 0 : i32
    return %c0_i32, %c0_i32_0 : i32, i32
  }
  func.func @transform_2(%arg0: i32) -> (i32, i32) {
    %c0_i32 = arith.constant 0 : i32
    %c0_i32_0 = arith.constant 0 : i32
    %c0_i32_1 = arith.constant 0 : i32
    return %c0_i32, %c0_i32_0 : i32, i32
  }
  func.func @transform_3(%arg0: i32) -> (i32, i32) {
    %c0_i32 = arith.constant 0 : i32
    %c0_i32_0 = arith.constant 0 : i32
    return %arg0, %c0_i32 : i32, i32
  }
}

</mosaic_0001>

<llo_original>
// kernel: tpu_custom_call.1
$region0: #{tpu_custom_call.1}
  #allocation0 [shape = 'u32[]', space=smem, size = 0x4, offset = 0x4, fixed_abs, tag = 'smem constant byte address 0x4 - core index']
  #allocation1 [shape = 'u32[144,128]{1,0:T(1,128)}', space=vmem, size = 0x12000, scoped, tag = 'internal scratch']
  %s0 = inlined_call_operand.hbm [shape: f32[16,32], index: 0, kind: input, shape index: {}]
  %s1 = inlined_call_operand.vmem [shape: f32[1,32], index: 1, kind: input, shape index: {}]
  %s2 = inlined_call_operand.vmem [shape: f32[1,32], index: 2, kind: input, shape index: {}]
  %s3 = inlined_call_operand.hbm [shape: f32[16,32], index: 3, kind: output, shape index: {}]
  %s4 = sld [smem:[#allocation0]]
  $region26: #{tpu_custom_call.1} parent=0
    _
  %s6 = ssub.s32 1, %s4
  %s7 = scalar_select 0, %s6, %s4
  $region1: #{tpu_custom_call.1} parent=0
    #allocation2 [shape = 'u8[8192]{0}', space=vmem, size = 0x2000, scoped, tag = 'input window, operand 0, single buffered']
    #allocation3 [shape = 's32[1]{0}', space=sflag, size = 0x4, scoped, tag = 'scoped memory for tpu_custom_call.1']
    #allocation4 [shape = 's32[1]{0}', space=sflag, size = 0x4, scoped, tag = 'scoped memory for tpu_custom_call.1']
    #allocation5 [shape = 'u8[8192]{0}', space=vmem, size = 0x2000, scoped, tag = 'output window, operand 0, single buffered']
    %8 = vsyncpa [#allocation3], 0
    %9 = vsyncpa [#allocation4], 0
    // Predicated region
    $region2: #{tpu_custom_call.1} parent=1 // pred_check
      _
    $region3: #{tpu_custom_call.1} parent=1 // pred_check_branch
      %11 = sbr.rel (0) target = $region5
    $region4: #{tpu_custom_call.1} parent=1 // pred_region
      %s13 = ssub.s32 256, 256
      %14 = vsyncadd [#allocation3], %s13
      %s15 = sshll.u32 [#allocation2], 4
      %s16 = int_to_ptr.vmem [resolvable:$true] %s15
      %21 = dma.hbm_to_vmem [thread:$0]  %s0, 256, %s16, [#allocation3], 128, 128, 8
    $region5: #{tpu_custom_call.1} parent=1 // pred_fallthru
      _
    // Predicated region
    $region6: #{tpu_custom_call.1} parent=1 // pred_check
      _
    $region7: #{tpu_custom_call.1} parent=1 // pred_check_branch
      %23 = sbr.rel (0) target = $region9
    $region8: #{tpu_custom_call.1} parent=1 // pred_region
      _
    $region9: #{tpu_custom_call.1} parent=1 // pred_fallthru
      _
    // Predicated region
    $region10: #{tpu_custom_call.1} parent=1 // pred_check
      _
    $region11: #{tpu_custom_call.1} parent=1 // pred_check_branch
      %25 = sbr.rel (0) target = $region13
    $region12: #{tpu_custom_call.1} parent=1 // pred_region
      _
    $region13: #{tpu_custom_call.1} parent=1 // pred_fallthru
      _
    // Predicated region
    $region14: #{tpu_custom_call.1} parent=1 // pred_check
      _
    $region15: #{tpu_custom_call.1} parent=1 // pred_check_branch
      %27 = sbr.rel (0) target = $region17
    $region16: #{tpu_custom_call.1} parent=1 // pred_region
      %28 = dma.done [#allocation3], 256
    $region17: #{tpu_custom_call.1} parent=1 // pred_fallthru
      _
    %v29 = vld [vmem:[#allocation2] sm:$0xff]
    %v30 = vld [vmem:[#allocation2 + $0x8] sm:$0xff]
    %vm31 = vcmask 261120
    %v32 = vsel %vm31, %v29, 0.0
    %33 = vadd.xlane.f32.xlu0 %v32
    %v34 = vpop.xlane.xlu0 %33
    %v35 = vsel %vm31, %v30, 0.0
    %36 = vadd.xlane.f32.xlu0 %v35
    %v37 = vpop.xlane.xlu0 %36
    %v38 = vmul.f32 %v34, 0.03125
    %v39 = vmul.f32 %v37, 0.03125
    %v40 = vsub.f32 %v29, %v38
    %v41 = vsub.f32 %v30, %v39
    %v42 = vmul.f32 %v40, %v40
    %v43 = vmul.f32 %v41, %v41
    %v44 = vsel %vm31, %v42, 0.0
    %45 = vadd.xlane.f32.xlu0 %v44
    %v46 = vpop.xlane.xlu0 %45
    %v47 = vsel %vm31, %v43, 0.0
    %48 = vadd.xlane.f32.xlu0 %v47
    %v49 = vpop.xlane.xlu0 %48
    %v50 = vmul.f32 %v46, 0.03125
    %v51 = vmul.f32 %v49, 0.03125
    %v52 = vadd.f32 %v50, 1e-05
    %v53 = vadd.f32 %v51, 1e-05
    %v54 = vrsqrt.pop %v52
    %v55 = vrsqrt.pop %v53
    %v56 = vmul.f32 %v40, %v54
    %v57 = vmul.f32 %v41, %v55
    %v58 = vld [vmem:[%s1] sm:$0x1]
    %v60 = vlaneseq
    %v61 = vshrl.u32 %v60, 7
    %v62 = vsub.s32 0, %v61
    %v63 = vrot.slane %v58, %v62
    %v65 = vmul.f32 %v56, %v63
    %v66 = vmul.f32 %v57, %v63
    %v67 = vld [vmem:[%s2] sm:$0x1]
    %v69 = vlaneseq
    %v70 = vshrl.u32 %v69, 7
    %v71 = vsub.s32 0, %v70
    %v72 = vrot.slane %v67, %v71
    %v74 = vadd.f32 %v65, %v72
    %v75 = vadd.f32 %v66, %v72
    %76 = vst.msk [vmem:[#allocation5] sm:$0xff] %vm31, %v74
    %77 = vst.msk [vmem:[#allocation5 + $0x8] sm:$0xff] %vm31, %v75
    // Predicated region
    $region18: #{tpu_custom_call.1} parent=1 // pred_check
      _
    $region19: #{tpu_custom_call.1} parent=1 // pred_check_branch
      %79 = sbr.rel (0) target = $region21
    $region20: #{tpu_custom_call.1} parent=1 // pred_region
      %s81 = ssub.s32 256, 256
      %82 = vsyncadd [#allocation4], %s81
      %s83 = sshll.u32 [#allocation5], 4
      %s84 = int_to_ptr.vmem [resolvable:$true] %s83
      %89 = dma.vmem_to_hbm [thread:$0]  %s84, 256, %s3, [#allocation4], 128, 128, 8
    $region21: #{tpu_custom_call.1} parent=1 // pred_fallthru
      _
    // Predicated region
    $region22: #{tpu_custom_call.1} parent=1 // pred_check
      _
    $region23: #{tpu_custom_call.1} parent=1 // pred_check_branch
      %91 = sbr.rel (0) target = $region25
    $region24: #{tpu_custom_call.1} parent=1 // pred_region
      %92 = dma.done [#allocation4], 256
    $region25: #{tpu_custom_call.1} parent=1 // pred_fallthru
      _
    %93 = vsyncpa [#allocation3], 1
    %94 = vsyncpa [#allocation4], 1

</llo_original>
